<compile_context>
chip_gen: v6e
topology: v6e:2x2x1
jax: 0.10.0
libtpu: 0.0.40
codegen_flags: <defaults>
</compile_context>

<pallas_src>
import math
import functools

import jax
import jax.numpy as jnp
from jax.experimental import pallas as pl
from jax.experimental.pallas import tpu as pltpu


# ---------------------------------------------------------------------------
# Helpers: padding, per-generation VMEM budget, tile planning
# ---------------------------------------------------------------------------

def _round_up(x, m):
    return ((x + m - 1) // m) * m


def _pad2(a, rows, cols):
    pr, pc = rows - a.shape[0], cols - a.shape[1]
    if pr == 0 and pc == 0:
        return a
    return jnp.pad(a, ((0, pr), (0, pc)))


def _vmem_limit_bytes():
    """Per-generation VMEM limit (3/4 of physical, conservative fallback)."""
    phys = None
    try:
        info = pltpu.get_tpu_info()
        for attr in ("vmem_capacity_bytes", "vmem_bytes", "vmem_size_bytes"):
            v = getattr(info, attr, None)
            if v:
                phys = int(v)
                break
    except Exception:
        phys = None
    if not phys:
        phys = 64 * 1024 * 1024            # conservative: v7x per-TC physical VMEM
    limit = min((phys * 3) // 4, 112 * 1024 * 1024)
    return max(int(limit), 32 * 1024 * 1024)


_VMEM_LIMIT = _vmem_limit_bytes()
_TILE_BUDGET = min(int(_VMEM_LIMIT * 0.7), 64 * 1024 * 1024)


def _divisor_tiles(n_pad, cap):
    """Multiples of 128 that divide n_pad (itself a multiple of 128), <= cap."""
    cap = min(cap, n_pad)
    return [t for t in range(128, cap + 1, 128) if n_pad % t == 0]


def _plan_tiles(n_pad, f_acc_p, f_out_p, adj_bytes, out_bytes,
                resident_bytes, budget):
    """Pick (TM, TK) dividing n_pad maximizing the streamed adj tile under budget."""
    tm_cands = _divisor_tiles(n_pad, 1024)
    tk_cands = _divisor_tiles(n_pad, 4096)
    best = (tm_cands[0], tk_cands[0])
    best_key = (-1, -1)
    for tm in tm_cands:
        for tk in tk_cands:
            need = (2 * tm * tk * adj_bytes           # adj tile (double-buffered)
                    + 2 * tk * f_acc_p * 2            # bf16 K-slab (double-buffered)
                    + tm * f_acc_p * 4                # f32 accumulator
                    + 2 * tm * f_out_p * out_bytes    # out tile (double-buffered)
                    + resident_bytes)                 # weights / bias
            if need <= budget:
                key = (tm * tk, tm)                   # max adj tile, prefer big TM
                if key > best_key:
                    best_key, best = key, (tm, tk)
    return best


# ---------------------------------------------------------------------------
# Kernels
# ---------------------------------------------------------------------------

def _gcn_reassoc_kernel(adj_ref, x_ref, w1_ref, w2_ref, b_ref, o_ref, acc_ref):
    """K-tiled ((adj @ x) @ W1) @ W2 + bias  (used when F_in <= F_out).

    adj_ref: (TM, TK) tile (any dtype, cast to bf16 in VMEM)
    x_ref:   (TK, F_in_p) bf16 K-slab
    acc_ref: (TM, F_in_p) f32 accumulator (persists across the K grid axis)
    """
    k = pl.program_id(1)

    @pl.when(k == 0)
    def _():
        acc_ref[...] = jnp.zeros_like(acc_ref)

    acc_ref[...] += jnp.dot(adj_ref[...].astype(jnp.bfloat16), x_ref[...],
                            preferred_element_type=jnp.float32)

    @pl.when(k == pl.num_programs(1) - 1)
    def _():
        h = jnp.dot(acc_ref[...].astype(jnp.bfloat16), w1_ref[...],
                    preferred_element_type=jnp.float32)
        h = jnp.dot(h.astype(jnp.bfloat16), w2_ref[...],
                    preferred_element_type=jnp.float32)
        o_ref[...] = (h + b_ref[...]).astype(o_ref.dtype)


def _gcn_support_kernel(x_ref, w1_ref, w2_ref, s_ref):
    """support_tile = (x_tile @ W1) @ W2   (gridded over node rows, bf16 out)."""
    s = jnp.dot(x_ref[...], w1_ref[...], preferred_element_type=jnp.float32)
    s = jnp.dot(s.astype(jnp.bfloat16), w2_ref[...],
                preferred_element_type=jnp.float32)
    s_ref[...] = s.astype(s_ref.dtype)


def _gcn_aggregate_kernel(adj_ref, s_ref, b_ref, o_ref, acc_ref):
    """K-tiled adj @ support + bias  (used when F_in > F_out)."""
    k = pl.program_id(1)

    @pl.when(k == 0)
    def _():
        acc_ref[...] = jnp.zeros_like(acc_ref)

    acc_ref[...] += jnp.dot(adj_ref[...].astype(jnp.bfloat16), s_ref[...],
                            preferred_element_type=jnp.float32)

    @pl.when(k == pl.num_programs(1) - 1)
    def _():
        o_ref[...] = (acc_ref[...] + b_ref[...]).astype(o_ref.dtype)


# ---------------------------------------------------------------------------
# Wrapper
# ---------------------------------------------------------------------------

@jax.jit
def graph_convolution(x, adj, w1, w2, bias=None):
    """Pallas TPU implementation of GraphConvolution.forward."""
    n, f_in = x.shape
    f_mid = w1.shape[1]
    f_out = w2.shape[1]
    out_dtype = x.dtype
    out_bytes = jnp.dtype(out_dtype).itemsize

    n_pad = _round_up(n, 128)
    f_in_p = _round_up(f_in, 128)
    f_mid_p = _round_up(f_mid, 128)
    f_out_p = _round_up(f_out, 128)

    # adj: stream in place when already lane-aligned (no extra N^2 HBM pass),
    # otherwise the single unavoidable pad pass also casts to bf16.
    if n == n_pad:
        adj_p = adj
    else:
        adj_p = _pad2(adj.astype(jnp.bfloat16), n_pad, n_pad)
    adj_bytes = jnp.dtype(adj_p.dtype).itemsize

    # Small operands: bf16 + 128-aligned padding (cheap, O(N*F)).
    x_p = _pad2(x.astype(jnp.bfloat16), n_pad, f_in_p)
    w1_p = _pad2(w1.astype(jnp.bfloat16), f_in_p, f_mid_p)
    w2_p = _pad2(w2.astype(jnp.bfloat16), f_mid_p, f_out_p)
    if bias is None:
        b_p = jnp.zeros((1, f_out_p), jnp.float32)
    else:
        b_p = _pad2(bias.astype(jnp.float32), 1, f_out_p)

    bias_spec = pl.BlockSpec((1, f_out_p), lambda i, k: (0, 0))
    params_2d = pltpu.CompilerParams(
        dimension_semantics=("parallel", "arbitrary"),
        vmem_limit_bytes=_VMEM_LIMIT)

    if f_in <= f_out:
        # ((adj @ x) @ W1) @ W2 : the N^2 contraction touches the smaller F_in.
        resident = (2 * (f_in_p * f_mid_p + f_mid_p * f_out_p) * 2
                    + 2 * f_out_p * 4)
        tm, tk = _plan_tiles(n_pad, f_in_p, f_out_p, adj_bytes, out_bytes,
                             resident, _TILE_BUDGET)
        grid = (n_pad // tm, n_pad // tk)
        cost = pl.CostEstimate(
            flops=2 * n_pad * n_pad * f_in_p
            + 2 * n_pad * (f_in_p * f_mid_p + f_mid_p * f_out_p),
            transcendentals=0,
            bytes_accessed=n_pad * n_pad * adj_bytes
            + grid[0] * n_pad * f_in_p * 2
            + (f_in_p * f_mid_p + f_mid_p * f_out_p) * 2
            + n_pad * f_out_p * out_bytes,
        )
        out_p = pl.pallas_call(
            _gcn_reassoc_kernel,
            out_shape=jax.ShapeDtypeStruct((n_pad, f_out_p), out_dtype),
            grid_spec=pltpu.PrefetchScalarGridSpec(
                num_scalar_prefetch=0,
                grid=grid,
                in_specs=[
                    pl.BlockSpec((tm, tk), lambda i, k: (i, k)),         # adj tile
                    pl.BlockSpec((tk, f_in_p), lambda i, k: (k, 0)),     # x K-slab
                    pl.BlockSpec((f_in_p, f_mid_p), lambda i, k: (0, 0)),   # W1
                    pl.BlockSpec((f_mid_p, f_out_p), lambda i, k: (0, 0)),  # W2
                    bias_spec,                                              # bias
                ],
                out_specs=pl.BlockSpec((tm, f_out_p), lambda i, k: (i, 0)),
                scratch_shapes=[pltpu.VMEM((tm, f_in_p), jnp.float32)],
            ),
            compiler_params=params_2d,
            cost_estimate=cost,
        )(adj_p, x_p, w1_p, w2_p, b_p)
    else:
        # support = (x @ W1) @ W2 computed exactly once (small gridded kernel),
        # then out = adj @ support (K-tiled) + bias.
        ts = _divisor_tiles(n_pad, 512)[-1]
        support = pl.pallas_call(
            _gcn_support_kernel,
            out_shape=jax.ShapeDtypeStruct((n_pad, f_out_p), jnp.bfloat16),
            grid_spec=pltpu.PrefetchScalarGridSpec(
                num_scalar_prefetch=0,
                grid=(n_pad // ts,),
                in_specs=[
                    pl.BlockSpec((ts, f_in_p), lambda i: (i, 0)),
                    pl.BlockSpec((f_in_p, f_mid_p), lambda i: (0, 0)),
                    pl.BlockSpec((f_mid_p, f_out_p), lambda i: (0, 0)),
                ],
                out_specs=pl.BlockSpec((ts, f_out_p), lambda i: (i, 0)),
            ),
            compiler_params=pltpu.CompilerParams(
                dimension_semantics=("parallel",),
                vmem_limit_bytes=_VMEM_LIMIT),
        )(x_p, w1_p, w2_p)

        resident = 2 * f_out_p * 4
        tm, tk = _plan_tiles(n_pad, f_out_p, f_out_p, adj_bytes, out_bytes,
                             resident, _TILE_BUDGET)
        grid = (n_pad // tm, n_pad // tk)
        cost = pl.CostEstimate(
            flops=2 * n_pad * n_pad * f_out_p,
            transcendentals=0,
            bytes_accessed=n_pad * n_pad * adj_bytes
            + grid[0] * n_pad * f_out_p * 2
            + n_pad * f_out_p * out_bytes,
        )
        out_p = pl.pallas_call(
            _gcn_aggregate_kernel,
            out_shape=jax.ShapeDtypeStruct((n_pad, f_out_p), out_dtype),
            grid_spec=pltpu.PrefetchScalarGridSpec(
                num_scalar_prefetch=0,
                grid=grid,
                in_specs=[
                    pl.BlockSpec((tm, tk), lambda i, k: (i, k)),        # adj tile
                    pl.BlockSpec((tk, f_out_p), lambda i, k: (k, 0)),   # support slab
                    bias_spec,                                          # bias
                ],
                out_specs=pl.BlockSpec((tm, f_out_p), lambda i, k: (i, 0)),
                scratch_shapes=[pltpu.VMEM((tm, f_out_p), jnp.float32)],
            ),
            compiler_params=params_2d,
            cost_estimate=cost,
        )(adj_p, support, b_p)

    return out_p[:n, :f_out]


def init_gcn_params(key, in_features, out_features, bias=False):
    """Deterministic re-implementation of GraphConvolution.reset_parameters."""
    middle_features = max(32, (in_features + out_features) // 16)
    k1, k2, k3 = jax.random.split(key, 3)

    stdv1 = 1.0 / math.sqrt(middle_features)   # weight1.size(1)
    w1 = jax.random.uniform(
        k1, (in_features, middle_features), jnp.float32, -stdv1, stdv1)

    stdv2 = 1.0 / math.sqrt(out_features)      # weight2.size(1)
    w2 = jax.random.uniform(
        k2, (middle_features, out_features), jnp.float32, -stdv2, stdv2)

    b = None
    if bias:
        b = jax.random.uniform(k3, (1, out_features), jnp.float32, -stdv2, stdv2)
    return w1, w2, b


if __name__ == "__main__":
    key = jax.random.PRNGKey(0)

    # --- config A: F_in < F_out -> reassociated path, no bias --------------
    num_nodes, in_features, out_features = 16, 16, 64
    k_x, k_adj, k_p, key = jax.random.split(key, 4)
    x = jax.random.normal(k_x, (num_nodes, in_features), jnp.float32)
    adj = jax.random.uniform(k_adj, (num_nodes, num_nodes), jnp.float32)
    w1, w2, _ = init_gcn_params(k_p, in_features, out_features, bias=False)

    out = graph_convolution(x, adj, w1, w2)
    jax.block_until_ready(out)
    ref = adj @ ((x @ w1) @ w2)
    assert out.shape == (num_nodes, out_features)
    # bf16 adj/x/weights + reassociation change rounding -> relaxed tolerance.
    assert jnp.allclose(out, ref, atol=1e-1, rtol=1e-1), \
        float(jnp.max(jnp.abs(out - ref)))

    # --- config B: F_in > F_out -> precomputed-support path, with bias -----
    num_nodes, in_features, out_features = 24, 96, 48
    k_x, k_adj, k_p, key = jax.random.split(key, 4)
    x = jax.random.normal(k_x, (num_nodes, in_features), jnp.float32)
    adj = jax.random.uniform(k_adj, (num_nodes, num_nodes), jnp.float32)
    w1, w2, b = init_gcn_params(k_p, in_features, out_features, bias=True)

    out = graph_convolution(x, adj, w1, w2, b)
    jax.block_until_ready(out)
    ref = adj @ ((x @ w1) @ w2) + b
    assert out.shape == (num_nodes, out_features)
    assert jnp.allclose(out, ref, atol=1e-1, rtol=1e-1), \
        float(jnp.max(jnp.abs(out - ref)))

    print("KERNEL_OK")
</pallas_src>

<mosaic_0001>
module attributes {stable_mosaic.version = 11 : i64} {
  func.func @_gcn_reassoc_kernel(%arg0: i32, %arg1: i32, %arg2: memref<128x128xbf16, #tpu.memory_space<vmem>>, %arg3: memref<128x128xbf16, #tpu.memory_space<vmem>>, %arg4: memref<128x128xbf16, #tpu.memory_space<vmem>>, %arg5: memref<128x128xbf16, #tpu.memory_space<vmem>>, %arg6: memref<1x128xf32, #tpu.memory_space<vmem>>, %arg7: memref<128x128xf32, #tpu.memory_space<vmem>>, %arg8: memref<128x128xf32, #tpu.memory_space<vmem>>) attributes {dimension_semantics = [#tpu.dimension_semantics<parallel>, #tpu.dimension_semantics<arbitrary>], iteration_bounds = array<i64: 1, 1>, scalar_prefetch = 0 : i64, scratch_operands = 1 : i64, tpu.core_type = #tpu.core_type<tc>, window_params = [{transform_indices = @transform_0, window_bounds = array<i64: 128, 128>}, {transform_indices = @transform_1, window_bounds = array<i64: 128, 128>}, {pipeline_mode = #tpu.pipeline_mode<synchronous>, transform_indices = @transform_2, window_bounds = array<i64: 128, 128>}, {pipeline_mode = #tpu.pipeline_mode<synchronous>, transform_indices = @transform_3, window_bounds = array<i64: 128, 128>}, {pipeline_mode = #tpu.pipeline_mode<synchronous>, transform_indices = @transform_4, window_bounds = array<i64: 1, 128>}, {transform_indices = @transform_5, window_bounds = array<i64: 128, 128>}]} {
    %c0_i32 = arith.constant 0 : i32
    %0 = arith.cmpi eq, %arg1, %c0_i32 : i32
    %1 = arith.extui %0 : i1 to i32
    %c0_i32_0 = arith.constant 0 : i32
    %2 = arith.cmpi ne, %1, %c0_i32_0 : i32
    scf.if %2 {
      %cst_10 = arith.constant 0.000000e+00 : f32
      %12 = vector.broadcast %cst_10 : f32 to vector<128x128xf32>
      %c0_11 = arith.constant 0 : index
      %c0_12 = arith.constant 0 : index
      %13 = vector.load %arg8[%c0_11, %c0_12] : memref<128x128xf32, #tpu.memory_space<vmem>>, vector<128x128xf32>
      tpu.vector_store %arg8[%c0_11, %c0_12], %12 {strides = array<i32>} : memref<128x128xf32, #tpu.memory_space<vmem>>, vector<128x128xf32>,
    } else {
    }
    %c0 = arith.constant 0 : index
    %c0_1 = arith.constant 0 : index
    %3 = vector.load %arg8[%c0, %c0_1] : memref<128x128xf32, #tpu.memory_space<vmem>>, vector<128x128xf32>
    %c0_2 = arith.constant 0 : index
    %c0_3 = arith.constant 0 : index
    %4 = vector.load %arg2[%c0_2, %c0_3] : memref<128x128xbf16, #tpu.memory_space<vmem>>, vector<128x128xbf16>
    %c0_4 = arith.constant 0 : index
    %c0_5 = arith.constant 0 : index
    %5 = vector.load %arg3[%c0_4, %c0_5] : memref<128x128xbf16, #tpu.memory_space<vmem>>, vector<128x128xbf16>
    %cst = arith.constant dense<0.000000e+00> : vector<128x128xf32>
    %6 = tpu.matmul %4, %5, %cst {dimension_numbers = #tpu.dot_dimension_numbers<[1], [0], [0], [1], [0, 0, 1, 1], [], []>} : vector<128x128xbf16>, vector<128x128xbf16>, vector<128x128xf32> -> vector<128x128xf32>
    %7 = arith.addf %3, %6 : vector<128x128xf32>
    %c0_6 = arith.constant 0 : index
    %c0_7 = arith.constant 0 : index
    %8 = vector.load %arg8[%c0_6, %c0_7] : memref<128x128xf32, #tpu.memory_space<vmem>>, vector<128x128xf32>
    tpu.vector_store %arg8[%c0_6, %c0_7], %7 {strides = array<i32>} : memref<128x128xf32, #tpu.memory_space<vmem>>, vector<128x128xf32>,
    %c0_i32_8 = arith.constant 0 : i32
    %9 = arith.cmpi eq, %arg1, %c0_i32_8 : i32
    %10 = arith.extui %9 : i1 to i32
    %c0_i32_9 = arith.constant 0 : i32
    %11 = arith.cmpi ne, %10, %c0_i32_9 : i32
    scf.if %11 {
      %c0_10 = arith.constant 0 : index
      %c0_11 = arith.constant 0 : index
      %12 = vector.load %arg8[%c0_10, %c0_11] : memref<128x128xf32, #tpu.memory_space<vmem>>, vector<128x128xf32>
      %13 = arith.truncf %12 : vector<128x128xf32> to vector<128x128xbf16>
      %c0_12 = arith.constant 0 : index
      %c0_13 = arith.constant 0 : index
      %14 = vector.load %arg4[%c0_12, %c0_13] : memref<128x128xbf16, #tpu.memory_space<vmem>>, vector<128x128xbf16>
      %cst_14 = arith.constant dense<0.000000e+00> : vector<128x128xf32>
      %15 = tpu.matmul %13, %14, %cst_14 {dimension_numbers = #tpu.dot_dimension_numbers<[1], [0], [0], [1], [0, 0, 1, 1], [], []>} : vector<128x128xbf16>, vector<128x128xbf16>, vector<128x128xf32> -> vector<128x128xf32>
      %16 = arith.truncf %15 : vector<128x128xf32> to vector<128x128xbf16>
      %c0_15 = arith.constant 0 : index
      %c0_16 = arith.constant 0 : index
      %17 = vector.load %arg5[%c0_15, %c0_16] : memref<128x128xbf16, #tpu.memory_space<vmem>>, vector<128x128xbf16>
      %cst_17 = arith.constant dense<0.000000e+00> : vector<128x128xf32>
      %18 = tpu.matmul %16, %17, %cst_17 {dimension_numbers = #tpu.dot_dimension_numbers<[1], [0], [0], [1], [0, 0, 1, 1], [], []>} : vector<128x128xbf16>, vector<128x128xbf16>, vector<128x128xf32> -> vector<128x128xf32>
      %c0_18 = arith.constant 0 : index
      %c0_19 = arith.constant 0 : index
      %19 = vector.load %arg6[%c0_18, %c0_19] : memref<1x128xf32, #tpu.memory_space<vmem>>, vector<1x128xf32>
      %20 = vector.broadcast %19 : vector<1x128xf32> to vector<128x128xf32>
      %21 = arith.addf %18, %20 : vector<128x128xf32>
      %c0_20 = arith.constant 0 : index
      %c0_21 = arith.constant 0 : index
      %22 = vector.load %arg7[%c0_20, %c0_21] : memref<128x128xf32, #tpu.memory_space<vmem>>, vector<128x128xf32>
      tpu.vector_store %arg7[%c0_20, %c0_21], %21 {strides = array<i32>} : memref<128x128xf32, #tpu.memory_space<vmem>>, vector<128x128xf32>,
    } else {
    }
    return
  }
  func.func @transform_0(%arg0: i32, %arg1: i32) -> (i32, i32) {
    %c0_i32 = arith.constant 0 : i32
    return %arg0, %arg1 : i32, i32
  }
  func.func @transform_1(%arg0: i32, %arg1: i32) -> (i32, i32) {
    %c0_i32 = arith.constant 0 : i32
    %c0_i32_0 = arith.constant 0 : i32
    return %arg1, %c0_i32 : i32, i32
  }
  func.func @transform_2(%arg0: i32, %arg1: i32) -> (i32, i32) {
    %c0_i32 = arith.constant 0 : i32
    %c0_i32_0 = arith.constant 0 : i32
    %c0_i32_1 = arith.constant 0 : i32
    return %c0_i32, %c0_i32_0 : i32, i32
  }
  func.func @transform_3(%arg0: i32, %arg1: i32) -> (i32, i32) {
    %c0_i32 = arith.constant 0 : i32
    %c0_i32_0 = arith.constant 0 : i32
    %c0_i32_1 = arith.constant 0 : i32
    return %c0_i32, %c0_i32_0 : i32, i32
  }
  func.func @transform_4(%arg0: i32, %arg1: i32) -> (i32, i32) {
    %c0_i32 = arith.constant 0 : i32
    %c0_i32_0 = arith.constant 0 : i32
    %c0_i32_1 = arith.constant 0 : i32
    return %c0_i32, %c0_i32_0 : i32, i32
  }
  func.func @transform_5(%arg0: i32, %arg1: i32) -> (i32, i32) {
    %c0_i32 = arith.constant 0 : i32
    %c0_i32_0 = arith.constant 0 : i32
    return %arg0, %c0_i32 : i32, i32
  }
}

</mosaic_0001>

<llo_original>
// kernel: graph_convolution.1
$region0: #{graph_convolution.1}
  #allocation0 [shape = 'u32[]', space=smem, size = 0x4, offset = 0x4, fixed_abs, tag = 'smem constant byte address 0x4 - core index']
  #allocation1 [shape = 'u32[144,128]{1,0:T(1,128)}', space=vmem, size = 0x12000, scoped, tag = 'internal scratch']
  #allocation2 [shape = 'f32[128,128]{1,0:T(8,128)}', space=vmem, size = 0x10000, scoped, tag = 'scratch operand']
  %s0 = inlined_call_operand.vmem [shape: bf16[128,128], index: 0, kind: input, shape index: {}]
  %s1 = inlined_call_operand.vmem [shape: bf16[128,128], index: 1, kind: input, shape index: {}]
  %s2 = inlined_call_operand.vmem [shape: bf16[128,128], index: 2, kind: input, shape index: {}]
  %s3 = inlined_call_operand.vmem [shape: bf16[128,128], index: 3, kind: input, shape index: {}]
  %s4 = inlined_call_operand.vmem [shape: f32[1,128], index: 4, kind: input, shape index: {}]
  %s5 = inlined_call_operand.vmem [shape: f32[128,128], index: 5, kind: output, shape index: {}]
  %s6 = sld [smem:[#allocation0]]
  $region38: #{graph_convolution.1} parent=0
    _
  %s8 = ssub.s32 1, %s6
  %s9 = scalar_select 0, %s8, %s6
  // Predicated region
  $region2: #{graph_convolution.1} parent=0 // pred_check
    _
  $region3: #{graph_convolution.1} parent=0 // pred_check_branch
    %11 = sbr.rel (0) target = $region5
  $region4: #{graph_convolution.1} parent=0 // pred_region
    _
  $region5: #{graph_convolution.1} parent=0 // pred_fallthru
    _
  // Predicated region
  $region6: #{graph_convolution.1} parent=0 // pred_check
    _
  $region7: #{graph_convolution.1} parent=0 // pred_check_branch
    %13 = sbr.rel (0) target = $region9
  $region8: #{graph_convolution.1} parent=0 // pred_region
    _
  $region9: #{graph_convolution.1} parent=0 // pred_fallthru
    _
  // Predicated region
  $region10: #{graph_convolution.1} parent=0 // pred_check
    _
  $region11: #{graph_convolution.1} parent=0 // pred_check_branch
    %15 = sbr.rel (0) target = $region13
  $region12: #{graph_convolution.1} parent=0 // pred_region
    _
  $region13: #{graph_convolution.1} parent=0 // pred_fallthru
    _
  // Predicated region
  $region14: #{graph_convolution.1} parent=0 // pred_check
    _
  $region15: #{graph_convolution.1} parent=0 // pred_check_branch
    %17 = sbr.rel (0) target = $region17
  $region16: #{graph_convolution.1} parent=0 // pred_region
    _
  $region17: #{graph_convolution.1} parent=0 // pred_fallthru
    _
  // Predicated region
  $region18: #{graph_convolution.1} parent=0 // pred_check
    _
  $region19: #{graph_convolution.1} parent=0 // pred_check_branch
    %19 = sbr.rel (0) target = $region21
  $region20: #{graph_convolution.1} parent=0 // pred_region
    _
  $region21: #{graph_convolution.1} parent=0 // pred_fallthru
    _
  %p21 = scmp.eq.s32.totalorder 0, 0
  // Predicated region
  $region22: #{graph_convolution.1} parent=0 // pred_check
    %p22 = pneg %p21
  $region23: #{graph_convolution.1} parent=0 // pred_check_branch
    %24 = sbr.rel (%p22) target = $region25
  $region24: #{graph_convolution.1} parent=0 // pred_region
    %25 = vst [vmem:[#allocation2] sm:$0xff] 0.0
    %26 = vst [vmem:[#allocation2 + $0x8] sm:$0xff] 0.0
    %27 = vst [vmem:[#allocation2 + $0x10] sm:$0xff] 0.0
    %28 = vst [vmem:[#allocation2 + $0x18] sm:$0xff] 0.0
    %29 = vst [vmem:[#allocation2 + $0x20] sm:$0xff] 0.0
    %30 = vst [vmem:[#allocation2 + $0x28] sm:$0xff] 0.0
    %31 = vst [vmem:[#allocation2 + $0x30] sm:$0xff] 0.0
    %32 = vst [vmem:[#allocation2 + $0x38] sm:$0xff] 0.0
    %33 = vst [vmem:[#allocation2 + $0x40] sm:$0xff] 0.0
    %34 = vst [vmem:[#allocation2 + $0x48] sm:$0xff] 0.0
    %35 = vst [vmem:[#allocation2 + $0x50] sm:$0xff] 0.0
    %36 = vst [vmem:[#allocation2 + $0x58] sm:$0xff] 0.0
    %37 = vst [vmem:[#allocation2 + $0x60] sm:$0xff] 0.0
    %38 = vst [vmem:[#allocation2 + $0x68] sm:$0xff] 0.0
    %39 = vst [vmem:[#allocation2 + $0x70] sm:$0xff] 0.0
    %40 = vst [vmem:[#allocation2 + $0x78] sm:$0xff] 0.0
  $region25: #{graph_convolution.1} parent=0 // pred_fallthru
    _
  %v41 = vld [vmem:[#allocation2] sm:$0xff]
  %v42 = vld [vmem:[#allocation2 + $0x8] sm:$0xff]
  %v43 = vld [vmem:[#allocation2 + $0x10] sm:$0xff]
  %v44 = vld [vmem:[#allocation2 + $0x18] sm:$0xff]
  %v45 = vld [vmem:[#allocation2 + $0x20] sm:$0xff]
  %v46 = vld [vmem:[#allocation2 + $0x28] sm:$0xff]
  %v47 = vld [vmem:[#allocation2 + $0x30] sm:$0xff]
  %v48 = vld [vmem:[#allocation2 + $0x38] sm:$0xff]
  %v49 = vld [vmem:[#allocation2 + $0x40] sm:$0xff]
  %v50 = vld [vmem:[#allocation2 + $0x48] sm:$0xff]
  %v51 = vld [vmem:[#allocation2 + $0x50] sm:$0xff]
  %v52 = vld [vmem:[#allocation2 + $0x58] sm:$0xff]
  %v53 = vld [vmem:[#allocation2 + $0x60] sm:$0xff]
  %v54 = vld [vmem:[#allocation2 + $0x68] sm:$0xff]
  %v55 = vld [vmem:[#allocation2 + $0x70] sm:$0xff]
  %v56 = vld [vmem:[#allocation2 + $0x78] sm:$0xff]
  %v57 = vld [vmem:[%s0] sm:$0xf]
  %v58 = vld [vmem:[%s0 + $0x4] sm:$0xf]
  %v59 = vld [vmem:[%s0 + $0x8] sm:$0xf]
  %v60 = vld [vmem:[%s0 + $0xc] sm:$0xf]
  %v61 = vld [vmem:[%s0 + $0x10] sm:$0xf]
  %v62 = vld [vmem:[%s0 + $0x14] sm:$0xf]
  %v63 = vld [vmem:[%s0 + $0x18] sm:$0xf]
  %v64 = vld [vmem:[%s0 + $0x1c] sm:$0xf]
  %v65 = vld [vmem:[%s0 + $0x20] sm:$0xf]
  %v66 = vld [vmem:[%s0 + $0x24] sm:$0xf]
  %v67 = vld [vmem:[%s0 + $0x28] sm:$0xf]
  %v68 = vld [vmem:[%s0 + $0x2c] sm:$0xf]
  %v69 = vld [vmem:[%s0 + $0x30] sm:$0xf]
  %v70 = vld [vmem:[%s0 + $0x34] sm:$0xf]
  %v71 = vld [vmem:[%s0 + $0x38] sm:$0xf]
  %v72 = vld [vmem:[%s0 + $0x3c] sm:$0xf]
  %v73 = vld [vmem:[%s1] sm:$0xf]
  %v74 = vld [vmem:[%s1 + $0x4] sm:$0xf]
  %v75 = vld [vmem:[%s1 + $0x8] sm:$0xf]
  %v76 = vld [vmem:[%s1 + $0xc] sm:$0xf]
  %v77 = vld [vmem:[%s1 + $0x10] sm:$0xf]
  %v78 = vld [vmem:[%s1 + $0x14] sm:$0xf]
  %v79 = vld [vmem:[%s1 + $0x18] sm:$0xf]
  %v80 = vld [vmem:[%s1 + $0x1c] sm:$0xf]
  %v81 = vld [vmem:[%s1 + $0x20] sm:$0xf]
  %v82 = vld [vmem:[%s1 + $0x24] sm:$0xf]
  %v83 = vld [vmem:[%s1 + $0x28] sm:$0xf]
  %v84 = vld [vmem:[%s1 + $0x2c] sm:$0xf]
  %v85 = vld [vmem:[%s1 + $0x30] sm:$0xf]
  %v86 = vld [vmem:[%s1 + $0x34] sm:$0xf]
  %v87 = vld [vmem:[%s1 + $0x38] sm:$0xf]
  %v88 = vld [vmem:[%s1 + $0x3c] sm:$0xf]
  %v105 = vunpack.c.l.b16 %v57
  %v106 = vunpack.c.l.b16 %v58
  %v107 = vunpack.c.l.b16 %v59
  %v108 = vunpack.c.l.b16 %v60
  %v109 = vunpack.c.l.b16 %v61
  %v110 = vunpack.c.l.b16 %v62
  %v111 = vunpack.c.l.b16 %v63
  %v112 = vunpack.c.l.b16 %v64
  %v113 = vunpack.c.l.b16 %v65
  %v114 = vunpack.c.l.b16 %v66
  %v115 = vunpack.c.l.b16 %v67
  %v116 = vunpack.c.l.b16 %v68
  %v117 = vunpack.c.l.b16 %v69
  %v118 = vunpack.c.l.b16 %v70
  %v119 = vunpack.c.l.b16 %v71
  %v120 = vunpack.c.l.b16 %v72
  %v121 = vpack.c.b16 %v106, %v105
  %v122 = vpack.c.b16 %v108, %v107
  %v123 = vpack.c.b16 %v110, %v109
  %v124 = vpack.c.b16 %v112, %v111
  %v125 = vpack.c.b16 %v114, %v113
  %v126 = vpack.c.b16 %v116, %v115
  %v127 = vpack.c.b16 %v118, %v117
  %v128 = vpack.c.b16 %v120, %v119
  %v153 = vunpack.c.l.b16 %v73
  %v154 = vunpack.c.l.b16 %v74
  %v155 = vunpack.c.l.b16 %v75
  %v156 = vunpack.c.l.b16 %v76
  %v157 = vunpack.c.l.b16 %v77
  %v158 = vunpack.c.l.b16 %v78
  %v159 = vunpack.c.l.b16 %v79
  %v160 = vunpack.c.l.b16 %v80
  %v161 = vunpack.c.l.b16 %v81
  %v162 = vunpack.c.l.b16 %v82
  %v163 = vunpack.c.l.b16 %v83
  %v164 = vunpack.c.l.b16 %v84
  %v165 = vunpack.c.l.b16 %v85
  %v166 = vunpack.c.l.b16 %v86
  %v167 = vunpack.c.l.b16 %v87
  %v168 = vunpack.c.l.b16 %v88
  %v169 = vpack.c.b16 %v154, %v153
  %v170 = vpack.c.b16 %v156, %v155
  %v171 = vpack.c.b16 %v158, %v157
  %v172 = vpack.c.b16 %v160, %v159
  %v173 = vpack.c.b16 %v162, %v161
  %v174 = vpack.c.b16 %v164, %v163
  %v175 = vpack.c.b16 %v166, %v165
  %v176 = vpack.c.b16 %v168, %v167
  %185 = vmatprep.subr.bf16.mxu0 0
  %186 = vmatpush1.bf16.msra.mxu0 %v176
  %187 = vmatprep.subr.bf16.mxu0 0
  %188 = vmatpush1.bf16.msra.mxu0 %v175
  %189 = vmatprep.subr.bf16.mxu0 0
  %190 = vmatpush1.bf16.msra.mxu0 %v174
  %191 = vmatprep.subr.bf16.mxu0 0
  %192 = vmatpush1.bf16.msra.mxu0 %v173
  %193 = vmatprep.subr.bf16.mxu0 0
  %194 = vmatpush1.bf16.msra.mxu0 %v172
  %195 = vmatprep.subr.bf16.mxu0 0
  %196 = vmatpush1.bf16.msra.mxu0 %v171
  %197 = vmatprep.subr.bf16.mxu0 0
  %198 = vmatpush1.bf16.msra.mxu0 %v170
  %199 = vmatprep.subr.bf16.mxu0 0
  %200 = vmatpush1.bf16.msra.mxu0 %v169
  %201 = vmatprep.subr.bf16.mxu0 0
  %202 = vmatpush2.bf16.msra.mxu0 0
  %203 = vmatprep.subr.bf16.mxu0 0
  %204 = vmatpush2.bf16.msra.mxu0 0
  %205 = vmatprep.subr.bf16.mxu0 0
  %206 = vmatpush2.bf16.msra.mxu0 0
  %207 = vmatprep.subr.bf16.mxu0 0
  %208 = vmatpush2.bf16.msra.mxu0 0
  %209 = vmatprep.subr.bf16.mxu0 0
  %210 = vmatpush2.bf16.msra.mxu0 0
  %211 = vmatprep.subr.bf16.mxu0 0
  %212 = vmatpush2.bf16.msra.mxu0 0
  %213 = vmatprep.subr.bf16.mxu0 0
  %214 = vmatpush2.bf16.msra.mxu0 0
  %215 = vmatprep.subr.bf16.mxu0 0
  %216 = vmatpush2.bf16.msra.mxu0 0
  %217 = vmatprep.mubr.bf16.mxu0 0
  %218 = vmatmul.mubr.bf16.gmra.mxu0 %v121
  %v219 = vpop.f32.mrf.mxu0
  %v220 = vadd.f32 0.0, %v219
  %v221 = vpop.f32.mrf.mxu0
  %v222 = vpop.f32.mrf.mxu0
  %v223 = vadd.f32 0.0, %v222
  %v224 = vpop.f32.mrf.mxu0
  %225 = vmatprep.mubr.bf16.mxu0 0
  %226 = vmatmul.mubr.bf16.gmra.mxu0 %v122
  %v227 = vpop.f32.mrf.mxu0
  %v228 = vadd.f32 0.0, %v227
  %v229 = vpop.f32.mrf.mxu0
  %v230 = vpop.f32.mrf.mxu0
  %v231 = vadd.f32 0.0, %v230
  %v232 = vpop.f32.mrf.mxu0
  %233 = vmatprep.mubr.bf16.mxu0 0
  %234 = vmatmul.mubr.bf16.gmra.mxu0 %v123
  %v235 = vpop.f32.mrf.mxu0
  %v236 = vadd.f32 0.0, %v235
  %v237 = vpop.f32.mrf.mxu0
  %v238 = vpop.f32.mrf.mxu0
  %v239 = vadd.f32 0.0, %v238
  %v240 = vpop.f32.mrf.mxu0
  %241 = vmatprep.mubr.bf16.mxu0 0
  %242 = vmatmul.mubr.bf16.gmra.mxu0 %v124
  %v243 = vpop.f32.mrf.mxu0
  %v244 = vadd.f32 0.0, %v243
  %v245 = vpop.f32.mrf.mxu0
  %v246 = vpop.f32.mrf.mxu0
  %v247 = vadd.f32 0.0, %v246
  %v248 = vpop.f32.mrf.mxu0
  %249 = vmatprep.mubr.bf16.mxu0 0
  %250 = vmatmul.mubr.bf16.gmra.mxu0 %v125
  %v251 = vpop.f32.mrf.mxu0
  %v252 = vadd.f32 0.0, %v251
  %v253 = vpop.f32.mrf.mxu0
  %v254 = vpop.f32.mrf.mxu0
  %v255 = vadd.f32 0.0, %v254
  %v256 = vpop.f32.mrf.mxu0
  %257 = vmatprep.mubr.bf16.mxu0 0
  %258 = vmatmul.mubr.bf16.gmra.mxu0 %v126
  %v259 = vpop.f32.mrf.mxu0
  %v260 = vadd.f32 0.0, %v259
  %v261 = vpop.f32.mrf.mxu0
  %v262 = vpop.f32.mrf.mxu0
  %v263 = vadd.f32 0.0, %v262
  %v264 = vpop.f32.mrf.mxu0
  %265 = vmatprep.mubr.bf16.mxu0 0
  %266 = vmatmul.mubr.bf16.gmra.mxu0 %v127
  %v267 = vpop.f32.mrf.mxu0
  %v268 = vadd.f32 0.0, %v267
  %v269 = vpop.f32.mrf.mxu0
  %v270 = vpop.f32.mrf.mxu0
  %v271 = vadd.f32 0.0, %v270
  %v272 = vpop.f32.mrf.mxu0
  %273 = vmatprep.mubr.bf16.mxu0 0
  %274 = vmatmul.mubr.bf16.gmra.mxu0 %v128
  %v275 = vpop.f32.mrf.mxu0
  %v276 = vadd.f32 0.0, %v275
  %v277 = vpop.f32.mrf.mxu0
  %v278 = vpop.f32.mrf.mxu0
  %v279 = vadd.f32 0.0, %v278
  %v280 = vpop.f32.mrf.mxu0
  %281 = vdwg.mxu0
  %v282 = vadd.f32 %v41, %v220
  %v283 = vadd.f32 %v42, %v223
  %v284 = vadd.f32 %v43, %v228
  %v285 = vadd.f32 %v44, %v231
  %v286 = vadd.f32 %v45, %v236
  %v287 = vadd.f32 %v46, %v239
  %v288 = vadd.f32 %v47, %v244
  %v289 = vadd.f32 %v48, %v247
  %v290 = vadd.f32 %v49, %v252
  %v291 = vadd.f32 %v50, %v255
  %v292 = vadd.f32 %v51, %v260
  %v293 = vadd.f32 %v52, %v263
  %v294 = vadd.f32 %v53, %v268
  %v295 = vadd.f32 %v54, %v271
  %v296 = vadd.f32 %v55, %v276
  %v297 = vadd.f32 %v56, %v279
  %298 = vst [vmem:[#allocation2] sm:$0xff] %v282
  %299 = vst [vmem:[#allocation2 + $0x8] sm:$0xff] %v283
  %300 = vst [vmem:[#allocation2 + $0x10] sm:$0xff] %v284
  %301 = vst [vmem:[#allocation2 + $0x18] sm:$0xff] %v285
  %302 = vst [vmem:[#allocation2 + $0x20] sm:$0xff] %v286
  %303 = vst [vmem:[#allocation2 + $0x28] sm:$0xff] %v287
  %304 = vst [vmem:[#allocation2 + $0x30] sm:$0xff] %v288
  %305 = vst [vmem:[#allocation2 + $0x38] sm:$0xff] %v289
  %306 = vst [vmem:[#allocation2 + $0x40] sm:$0xff] %v290
  %307 = vst [vmem:[#allocation2 + $0x48] sm:$0xff] %v291
  %308 = vst [vmem:[#allocation2 + $0x50] sm:$0xff] %v292
  %309 = vst [vmem:[#allocation2 + $0x58] sm:$0xff] %v293
  %310 = vst [vmem:[#allocation2 + $0x60] sm:$0xff] %v294
  %311 = vst [vmem:[#allocation2 + $0x68] sm:$0xff] %v295
  %312 = vst [vmem:[#allocation2 + $0x70] sm:$0xff] %v296
  %313 = vst [vmem:[#allocation2 + $0x78] sm:$0xff] %v297
  // Predicated region
  $region26: #{graph_convolution.1} parent=0 // pred_check
    %p314 = pneg %p21
  $region27: #{graph_convolution.1} parent=0 // pred_check_branch
    %316 = sbr.rel (%p314) target = $region29
  $region28: #{graph_convolution.1} parent=0 // pred_region
    %v317 = vld [vmem:[#allocation2] sm:$0xff]
    %v318 = vld [vmem:[#allocation2 + $0x8] sm:$0xff]
    %v319 = vld [vmem:[#allocation2 + $0x10] sm:$0xff]
    %v320 = vld [vmem:[#allocation2 + $0x18] sm:$0xff]
    %v321 = vld [vmem:[#allocation2 + $0x20] sm:$0xff]
    %v322 = vld [vmem:[#allocation2 + $0x28] sm:$0xff]
    %v323 = vld [vmem:[#allocation2 + $0x30] sm:$0xff]
    %v324 = vld [vmem:[#allocation2 + $0x38] sm:$0xff]
    %v325 = vld [vmem:[#allocation2 + $0x40] sm:$0xff]
    %v326 = vld [vmem:[#allocation2 + $0x48] sm:$0xff]
    %v327 = vld [vmem:[#allocation2 + $0x50] sm:$0xff]
    %v328 = vld [vmem:[#allocation2 + $0x58] sm:$0xff]
    %v329 = vld [vmem:[#allocation2 + $0x60] sm:$0xff]
    %v330 = vld [vmem:[#allocation2 + $0x68] sm:$0xff]
    %v331 = vld [vmem:[#allocation2 + $0x70] sm:$0xff]
    %v332 = vld [vmem:[#allocation2 + $0x78] sm:$0xff]
    %v333 = vpack.c.bf16 %v318, %v317
    %v334 = vpack.c.bf16 %v320, %v319
    %v335 = vpack.c.bf16 %v322, %v321
    %v336 = vpack.c.bf16 %v324, %v323
    %v337 = vpack.c.bf16 %v326, %v325
    %v338 = vpack.c.bf16 %v328, %v327
    %v339 = vpack.c.bf16 %v330, %v329
    %v340 = vpack.c.bf16 %v332, %v331
    %v341 = vld [vmem:[%s2] sm:$0xf]
    %v342 = vld [vmem:[%s2 + $0x4] sm:$0xf]
    %v343 = vld [vmem:[%s2 + $0x8] sm:$0xf]
    %v344 = vld [vmem:[%s2 + $0xc] sm:$0xf]
    %v345 = vld [vmem:[%s2 + $0x10] sm:$0xf]
    %v346 = vld [vmem:[%s2 + $0x14] sm:$0xf]
    %v347 = vld [vmem:[%s2 + $0x18] sm:$0xf]
    %v348 = vld [vmem:[%s2 + $0x1c] sm:$0xf]
    %v349 = vld [vmem:[%s2 + $0x20] sm:$0xf]
    %v350 = vld [vmem:[%s2 + $0x24] sm:$0xf]
    %v351 = vld [vmem:[%s2 + $0x28] sm:$0xf]
    %v352 = vld [vmem:[%s2 + $0x2c] sm:$0xf]
    %v353 = vld [vmem:[%s2 + $0x30] sm:$0xf]
    %v354 = vld [vmem:[%s2 + $0x34] sm:$0xf]
    %v355 = vld [vmem:[%s2 + $0x38] sm:$0xf]
    %v356 = vld [vmem:[%s2 + $0x3c] sm:$0xf]
    %v373 = vunpack.c.l.b16 %v341
    %v374 = vunpack.c.l.b16 %v342
    %v375 = vunpack.c.l.b16 %v343
    %v376 = vunpack.c.l.b16 %v344
    %v377 = vunpack.c.l.b16 %v345
    %v378 = vunpack.c.l.b16 %v346
    %v379 = vunpack.c.l.b16 %v347
    %v380 = vunpack.c.l.b16 %v348
    %v381 = vunpack.c.l.b16 %v349
    %v382 = vunpack.c.l.b16 %v350
    %v383 = vunpack.c.l.b16 %v351
    %v384 = vunpack.c.l.b16 %v352
    %v385 = vunpack.c.l.b16 %v353
    %v386 = vunpack.c.l.b16 %v354
    %v387 = vunpack.c.l.b16 %v355
    %v388 = vunpack.c.l.b16 %v356
    %v389 = vpack.c.b16 %v374, %v373
    %v390 = vpack.c.b16 %v376, %v375
    %v391 = vpack.c.b16 %v378, %v377
    %v392 = vpack.c.b16 %v380, %v379
    %v393 = vpack.c.b16 %v382, %v381
    %v394 = vpack.c.b16 %v384, %v383
    %v395 = vpack.c.b16 %v386, %v385
    %v396 = vpack.c.b16 %v388, %v387
    %405 = vmatprep.subr.bf16.mxu0 0
    %406 = vmatpush1.bf16.msra.mxu0 %v396
    %407 = vmatprep.subr.bf16.mxu0 0
    %408 = vmatpush1.bf16.msra.mxu0 %v395
    %409 = vmatprep.subr.bf16.mxu0 0
    %410 = vmatpush1.bf16.msra.mxu0 %v394
    %411 = vmatprep.subr.bf16.mxu0 0
    %412 = vmatpush1.bf16.msra.mxu0 %v393
    %413 = vmatprep.subr.bf16.mxu0 0
    %414 = vmatpush1.bf16.msra.mxu0 %v392
    %415 = vmatprep.subr.bf16.mxu0 0
    %416 = vmatpush1.bf16.msra.mxu0 %v391
    %417 = vmatprep.subr.bf16.mxu0 0
    %418 = vmatpush1.bf16.msra.mxu0 %v390
    %419 = vmatprep.subr.bf16.mxu0 0
    %420 = vmatpush1.bf16.msra.mxu0 %v389
    %421 = vmatprep.subr.bf16.mxu0 0
    %422 = vmatpush2.bf16.msra.mxu0 0
    %423 = vmatprep.subr.bf16.mxu0 0
    %424 = vmatpush2.bf16.msra.mxu0 0
    %425 = vmatprep.subr.bf16.mxu0 0
    %426 = vmatpush2.bf16.msra.mxu0 0
    %427 = vmatprep.subr.bf16.mxu0 0
    %428 = vmatpush2.bf16.msra.mxu0 0
    %429 = vmatprep.subr.bf16.mxu0 0
    %430 = vmatpush2.bf16.msra.mxu0 0
    %431 = vmatprep.subr.bf16.mxu0 0
    %432 = vmatpush2.bf16.msra.mxu0 0
    %433 = vmatprep.subr.bf16.mxu0 0
    %434 = vmatpush2.bf16.msra.mxu0 0
    %435 = vmatprep.subr.bf16.mxu0 0
    %436 = vmatpush2.bf16.msra.mxu0 0
    %437 = vmatprep.mubr.bf16.mxu0 0
    %438 = vmatmul.mubr.bf16.gmra.mxu0 %v333
    %v439 = vpop.f32.mrf.mxu0
    %v440 = vadd.f32 0.0, %v439
    %v441 = vpop.f32.mrf.mxu0
    %v442 = vpop.f32.mrf.mxu0
    %v443 = vadd.f32 0.0, %v442
    %v444 = vpop.f32.mrf.mxu0
    %445 = vmatprep.mubr.bf16.mxu0 0
    %446 = vmatmul.mubr.bf16.gmra.mxu0 %v334
    %v447 = vpop.f32.mrf.mxu0
    %v448 = vadd.f32 0.0, %v447
    %v449 = vpop.f32.mrf.mxu0
    %v450 = vpop.f32.mrf.mxu0
    %v451 = vadd.f32 0.0, %v450
    %v452 = vpop.f32.mrf.mxu0
    %453 = vmatprep.mubr.bf16.mxu0 0
    %454 = vmatmul.mubr.bf16.gmra.mxu0 %v335
    %v455 = vpop.f32.mrf.mxu0
    %v456 = vadd.f32 0.0, %v455
    %v457 = vpop.f32.mrf.mxu0
    %v458 = vpop.f32.mrf.mxu0
    %v459 = vadd.f32 0.0, %v458
    %v460 = vpop.f32.mrf.mxu0
    %461 = vmatprep.mubr.bf16.mxu0 0
    %462 = vmatmul.mubr.bf16.gmra.mxu0 %v336
    %v463 = vpop.f32.mrf.mxu0
    %v464 = vadd.f32 0.0, %v463
    %v465 = vpop.f32.mrf.mxu0
    %v466 = vpop.f32.mrf.mxu0
    %v467 = vadd.f32 0.0, %v466
    %v468 = vpop.f32.mrf.mxu0
    %469 = vmatprep.mubr.bf16.mxu0 0
    %470 = vmatmul.mubr.bf16.gmra.mxu0 %v337
    %v471 = vpop.f32.mrf.mxu0
    %v472 = vadd.f32 0.0, %v471
    %v473 = vpop.f32.mrf.mxu0
    %v474 = vpop.f32.mrf.mxu0
    %v475 = vadd.f32 0.0, %v474
    %v476 = vpop.f32.mrf.mxu0
    %477 = vmatprep.mubr.bf16.mxu0 0
    %478 = vmatmul.mubr.bf16.gmra.mxu0 %v338
    %v479 = vpop.f32.mrf.mxu0
    %v480 = vadd.f32 0.0, %v479
    %v481 = vpop.f32.mrf.mxu0
    %v482 = vpop.f32.mrf.mxu0
    %v483 = vadd.f32 0.0, %v482
    %v484 = vpop.f32.mrf.mxu0
    %485 = vmatprep.mubr.bf16.mxu0 0
    %486 = vmatmul.mubr.bf16.gmra.mxu0 %v339
    %v487 = vpop.f32.mrf.mxu0
    %v488 = vadd.f32 0.0, %v487
    %v489 = vpop.f32.mrf.mxu0
    %v490 = vpop.f32.mrf.mxu0
    %v491 = vadd.f32 0.0, %v490
    %v492 = vpop.f32.mrf.mxu0
    %493 = vmatprep.mubr.bf16.mxu0 0
    %494 = vmatmul.mubr.bf16.gmra.mxu0 %v340
    %v495 = vpop.f32.mrf.mxu0
    %v496 = vadd.f32 0.0, %v495
    %v497 = vpop.f32.mrf.mxu0
    %v498 = vpop.f32.mrf.mxu0
    %v499 = vadd.f32 0.0, %v498
    %v500 = vpop.f32.mrf.mxu0
    %501 = vdwg.mxu0
    %v502 = vpack.c.bf16 %v443, %v440
    %v503 = vpack.c.bf16 %v451, %v448
    %v504 = vpack.c.bf16 %v459, %v456
    %v505 = vpack.c.bf16 %v467, %v464
    %v506 = vpack.c.bf16 %v475, %v472
    %v507 = vpack.c.bf16 %v483, %v480
    %v508 = vpack.c.bf16 %v491, %v488
    %v509 = vpack.c.bf16 %v499, %v496
    %v510 = vld [vmem:[%s3] sm:$0xf]
    %v511 = vld [vmem:[%s3 + $0x4] sm:$0xf]
    %v512 = vld [vmem:[%s3 + $0x8] sm:$0xf]
    %v513 = vld [vmem:[%s3 + $0xc] sm:$0xf]
    %v514 = vld [vmem:[%s3 + $0x10] sm:$0xf]
    %v515 = vld [vmem:[%s3 + $0x14] sm:$0xf]
    %v516 = vld [vmem:[%s3 + $0x18] sm:$0xf]
    %v517 = vld [vmem:[%s3 + $0x1c] sm:$0xf]
    %v518 = vld [vmem:[%s3 + $0x20] sm:$0xf]
    %v519 = vld [vmem:[%s3 + $0x24] sm:$0xf]
    %v520 = vld [vmem:[%s3 + $0x28] sm:$0xf]
    %v521 = vld [vmem:[%s3 + $0x2c] sm:$0xf]
    %v522 = vld [vmem:[%s3 + $0x30] sm:$0xf]
    %v523 = vld [vmem:[%s3 + $0x34] sm:$0xf]
    %v524 = vld [vmem:[%s3 + $0x38] sm:$0xf]
    %v525 = vld [vmem:[%s3 + $0x3c] sm:$0xf]
    %v526 = vld [vmem:[%s4] sm:$0x1]
    %v528 = vlaneseq
    %v529 = vshrl.u32 %v528, 7
    %v530 = vsub.s32 0, %v529
    %v531 = vrot.slane %v526, %v530
    %v549 = vunpack.c.l.b16 %v510
    %v550 = vunpack.c.l.b16 %v511
    %v551 = vunpack.c.l.b16 %v512
    %v552 = vunpack.c.l.b16 %v513
    %v553 = vunpack.c.l.b16 %v514
    %v554 = vunpack.c.l.b16 %v515
    %v555 = vunpack.c.l.b16 %v516
    %v556 = vunpack.c.l.b16 %v517
    %v557 = vunpack.c.l.b16 %v518
    %v558 = vunpack.c.l.b16 %v519
    %v559 = vunpack.c.l.b16 %v520
    %v560 = vunpack.c.l.b16 %v521
    %v561 = vunpack.c.l.b16 %v522
    %v562 = vunpack.c.l.b16 %v523
    %v563 = vunpack.c.l.b16 %v524
    %v564 = vunpack.c.l.b16 %v525
    %v565 = vpack.c.b16 %v550, %v549
    %v566 = vpack.c.b16 %v552, %v551
    %v567 = vpack.c.b16 %v554, %v553
    %v568 = vpack.c.b16 %v556, %v555
    %v569 = vpack.c.b16 %v558, %v557
    %v570 = vpack.c.b16 %v560, %v559
    %v571 = vpack.c.b16 %v562, %v561
    %v572 = vpack.c.b16 %v564, %v563
    %581 = vmatprep.subr.bf16.mxu0 0
    %582 = vmatpush1.bf16.msra.mxu0 %v572
    %583 = vmatprep.subr.bf16.mxu0 0
    %584 = vmatpush1.bf16.msra.mxu0 %v571
    %585 = vmatprep.subr.bf16.mxu0 0
    %586 = vmatpush1.bf16.msra.mxu0 %v570
    %587 = vmatprep.subr.bf16.mxu0 0
    %588 = vmatpush1.bf16.msra.mxu0 %v569
    %589 = vmatprep.subr.bf16.mxu0 0
    %590 = vmatpush1.bf16.msra.mxu0 %v568
    %591 = vmatprep.subr.bf16.mxu0 0
    %592 = vmatpush1.bf16.msra.mxu0 %v567
    %593 = vmatprep.subr.bf16.mxu0 0
    %594 = vmatpush1.bf16.msra.mxu0 %v566
    %595 = vmatprep.subr.bf16.mxu0 0
    %596 = vmatpush1.bf16.msra.mxu0 %v565
    %597 = vmatprep.subr.bf16.mxu0 0
    %598 = vmatpush2.bf16.msra.mxu0 0
    %599 = vmatprep.subr.bf16.mxu0 0
    %600 = vmatpush2.bf16.msra.mxu0 0
    %601 = vmatprep.subr.bf16.mxu0 0
    %602 = vmatpush2.bf16.msra.mxu0 0
    %603 = vmatprep.subr.bf16.mxu0 0
    %604 = vmatpush2.bf16.msra.mxu0 0
    %605 = vmatprep.subr.bf16.mxu0 0
    %606 = vmatpush2.bf16.msra.mxu0 0
    %607 = vmatprep.subr.bf16.mxu0 0
    %608 = vmatpush2.bf16.msra.mxu0 0
    %609 = vmatprep.subr.bf16.mxu0 0
    %610 = vmatpush2.bf16.msra.mxu0 0
    %611 = vmatprep.subr.bf16.mxu0 0
    %612 = vmatpush2.bf16.msra.mxu0 0
    %613 = vmatprep.mubr.bf16.mxu0 0
    %614 = vmatmul.mubr.bf16.gmra.mxu0 %v502
    %v615 = vpop.f32.mrf.mxu0
    %v616 = vadd.f32 %v531, %v615
    %v617 = vpop.f32.mrf.mxu0
    %v618 = vpop.f32.mrf.mxu0
    %v619 = vadd.f32 %v531, %v618
    %v620 = vpop.f32.mrf.mxu0
    %621 = vmatprep.mubr.bf16.mxu0 0
    %622 = vmatmul.mubr.bf16.gmra.mxu0 %v503
    %v623 = vpop.f32.mrf.mxu0
    %v624 = vadd.f32 %v531, %v623
    %v625 = vpop.f32.mrf.mxu0
    %v626 = vpop.f32.mrf.mxu0
    %v627 = vadd.f32 %v531, %v626
    %v628 = vpop.f32.mrf.mxu0
    %629 = vmatprep.mubr.bf16.mxu0 0
    %630 = vmatmul.mubr.bf16.gmra.mxu0 %v504
    %v631 = vpop.f32.mrf.mxu0
    %v632 = vadd.f32 %v531, %v631
    %v633 = vpop.f32.mrf.mxu0
    %v634 = vpop.f32.mrf.mxu0
    %v635 = vadd.f32 %v531, %v634
    %v636 = vpop.f32.mrf.mxu0
    %637 = vmatprep.mubr.bf16.mxu0 0
    %638 = vmatmul.mubr.bf16.gmra.mxu0 %v505
    %v639 = vpop.f32.mrf.mxu0
    %v640 = vadd.f32 %v531, %v639
    %v641 = vpop.f32.mrf.mxu0
    %v642 = vpop.f32.mrf.mxu0
    %v643 = vadd.f32 %v531, %v642
    %v644 = vpop.f32.mrf.mxu0
    %645 = vmatprep.mubr.bf16.mxu0 0
    %646 = vmatmul.mubr.bf16.gmra.mxu0 %v506
    %v647 = vpop.f32.mrf.mxu0
    %v648 = vadd.f32 %v531, %v647
    %v649 = vpop.f32.mrf.mxu0
    %v650 = vpop.f32.mrf.mxu0
    %v651 = vadd.f32 %v531, %v650
    %v652 = vpop.f32.mrf.mxu0
    %653 = vmatprep.mubr.bf16.mxu0 0
    %654 = vmatmul.mubr.bf16.gmra.mxu0 %v507
    %v655 = vpop.f32.mrf.mxu0
    %v656 = vadd.f32 %v531, %v655
    %v657 = vpop.f32.mrf.mxu0
    %v658 = vpop.f32.mrf.mxu0
    %v659 = vadd.f32 %v531, %v658
    %v660 = vpop.f32.mrf.mxu0
    %661 = vmatprep.mubr.bf16.mxu0 0
    %662 = vmatmul.mubr.bf16.gmra.mxu0 %v508
    %v663 = vpop.f32.mrf.mxu0
    %v664 = vadd.f32 %v531, %v663
    %v665 = vpop.f32.mrf.mxu0
    %v666 = vpop.f32.mrf.mxu0
    %v667 = vadd.f32 %v531, %v666
    %v668 = vpop.f32.mrf.mxu0
    %669 = vmatprep.mubr.bf16.mxu0 0
    %670 = vmatmul.mubr.bf16.gmra.mxu0 %v509
    %v671 = vpop.f32.mrf.mxu0
    %v672 = vadd.f32 %v531, %v671
    %v673 = vpop.f32.mrf.mxu0
    %v674 = vpop.f32.mrf.mxu0
    %v675 = vadd.f32 %v531, %v674
    %v676 = vpop.f32.mrf.mxu0
    %677 = vdwg.mxu0
    %678 = vst [vmem:[%s5] sm:$0xff] %v616
    %679 = vst [vmem:[%s5 + $0x8] sm:$0xff] %v619
    %680 = vst [vmem:[%s5 + $0x10] sm:$0xff] %v624
    %681 = vst [vmem:[%s5 + $0x18] sm:$0xff] %v627
    %682 = vst [vmem:[%s5 + $0x20] sm:$0xff] %v632
    %683 = vst [vmem:[%s5 + $0x28] sm:$0xff] %v635
    %684 = vst [vmem:[%s5 + $0x30] sm:$0xff] %v640
    %685 = vst [vmem:[%s5 + $0x38] sm:$0xff] %v643
    %686 = vst [vmem:[%s5 + $0x40] sm:$0xff] %v648
    %687 = vst [vmem:[%s5 + $0x48] sm:$0xff] %v651
    %688 = vst [vmem:[%s5 + $0x50] sm:$0xff] %v656
    %689 = vst [vmem:[%s5 + $0x58] sm:$0xff] %v659
    %690 = vst [vmem:[%s5 + $0x60] sm:$0xff] %v664
    %691 = vst [vmem:[%s5 + $0x68] sm:$0xff] %v667
    %692 = vst [vmem:[%s5 + $0x70] sm:$0xff] %v672
    %693 = vst [vmem:[%s5 + $0x78] sm:$0xff] %v675
  $region29: #{graph_convolution.1} parent=0 // pred_fallthru
    _
  // Predicated region
  $region30: #{graph_convolution.1} parent=0 // pred_check
    _
  $region31: #{graph_convolution.1} parent=0 // pred_check_branch
    %695 = sbr.rel (0) target = $region33
  $region32: #{graph_convolution.1} parent=0 // pred_region
    _
  $region33: #{graph_convolution.1} parent=0 // pred_fallthru
    _
  // Predicated region
  $region34: #{graph_convolution.1} parent=0 // pred_check
    _
  $region35: #{graph_convolution.1} parent=0 // pred_check_branch
    %697 = sbr.rel (0) target = $region37
  $region36: #{graph_convolution.1} parent=0 // pred_region
    _
  $region37: #{graph_convolution.1} parent=0 // pred_fallthru
    _

</llo_original>
